<compile_context>
chip_gen: v6e
topology: v6e:2x2x1
jax: 0.10.0
libtpu: 0.0.40
codegen_flags: <defaults>
</compile_context>

<pallas_src>
import jax
import jax.numpy as jnp
from jax.experimental import pallas as pl
from jax.experimental.pallas import tpu as pltpu

INPUT_CHANNEL = 2      # mask is (1, 2) in the PyTorch module, so C must be 2
HIDDEN = 256
LEAKY_SLOPE = 0.01     # nn.LeakyReLU default


def _round_up(n, m):
    return ((n + m - 1) // m) * m


def _coupling_fwd_kernel(x_ref, mask_ref,
                         w1_ref, b1_ref, w2_ref, b2_ref,
                         w3s_ref, b3s_ref, w3t_ref, b3t_ref,
                         y_ref, logdet_ref):
    x = x_ref[...]                        # [TB, C] f32
    mask = mask_ref[...]                  # [1, C] f32 (broadcast over batch)
    inv_mask = 1.0 - mask                 # (-mask + 1)
    C = x.shape[1]

    # x1 = x * mask
    x1 = x * mask

    # ---- Layer 1 (in=C=2, out=256): VPU broadcast multiply-adds, no MXU ----
    w1 = w1_ref[...]                      # [C, H] f32
    h = b1_ref[...]                       # [1, H]; broadcasts up on first add
    for c in range(C):                    # static C=2, unrolled at trace time
        h = h + x1[:, c:c + 1] * w1[c:c + 1, :]
    h = jnp.where(h > 0, h, LEAKY_SLOPE * h)          # LeakyReLU

    # ---- Layer 2 (256 -> 256): bf16 MXU matmul, f32 accumulation ----
    h2 = jnp.dot(h.astype(jnp.bfloat16), w2_ref[...],
                 preferred_element_type=jnp.float32) + b2_ref[...]
    h2 = jnp.where(h2 > 0, h2, LEAKY_SLOPE * h2)      # LeakyReLU
    h2b = h2.astype(jnp.bfloat16)

    # ---- Layer 3 (256 -> C, split s / t heads; avoids lane-slicing [B,2C]) ----
    s_pre = jnp.dot(h2b, w3s_ref[...],
                    preferred_element_type=jnp.float32) + b3s_ref[...]  # [TB, C]
    t = jnp.dot(h2b, w3t_ref[...],
                preferred_element_type=jnp.float32) + b3t_ref[...]      # [TB, C]

    s = jnp.tanh(s_pre * inv_mask)        # s masked then tanh
    t = t * inv_mask                      # t masked

    # y = x1 + (1 - mask) * (x * exp(s) + t)
    y_ref[...] = x1 + inv_mask * (x * jnp.exp(s) + t)

    # log_det_jacobian = sum(s, axis=1); C=2 -> explicit lane add (no XLU).
    ld = s[:, 0:1]
    for c in range(1, C):
        ld = ld + s[:, c:c + 1]
    logdet_ref[...] = ld


def coupling_layer_forward(x, mask, params, tile_b=512):
    """x: [B, C] f32; mask: [1, C] f32; params: dict of pre-transposed weights."""
    B, C = x.shape

    # Batch tile: multiple of 8 (sublane), capped at tile_b; pad B to a multiple.
    tb = _round_up(min(int(tile_b), _round_up(B, 8)), 8)
    B_pad = _round_up(B, tb)
    x_p = jnp.pad(x, ((0, B_pad - B), (0, 0))) if B_pad != B else x
    grid = (B_pad // tb,)

    # Weights: big matmul operands in bf16 (f32 accumulation in-kernel),
    # layer-1 (VPU path), biases and mask stay f32.
    w1 = params["w1"].astype(jnp.float32)
    b1 = params["b1"].astype(jnp.float32)
    w2 = params["w2"].astype(jnp.bfloat16)
    b2 = params["b2"].astype(jnp.float32)
    w3s = params["w3"][:, :C].astype(jnp.bfloat16)
    w3t = params["w3"][:, C:].astype(jnp.bfloat16)
    b3s = params["b3"][:, :C].astype(jnp.float32)
    b3t = params["b3"][:, C:].astype(jnp.float32)
    mask = mask.astype(jnp.float32)

    def row_spec(shape):
        # Batch-tiled operand: block index advances along the batch axis.
        return pl.BlockSpec((tb,) + tuple(shape[1:]),
                            lambda i: (i,) + (0,) * (len(shape) - 1))

    def const_spec(shape):
        # Weight/bias/mask: same block every step -> stays resident in VMEM.
        return pl.BlockSpec(tuple(shape), lambda i: (0,) * len(shape))

    y, logdet = pl.pallas_call(
        _coupling_fwd_kernel,
        grid=grid,
        out_shape=(
            jax.ShapeDtypeStruct((B_pad, C), jnp.float32),
            jax.ShapeDtypeStruct((B_pad, 1), jnp.float32),
        ),
        in_specs=[
            row_spec(x_p.shape),          # x  (tiled over batch)
            const_spec(mask.shape),       # mask
            const_spec(w1.shape), const_spec(b1.shape),
            const_spec(w2.shape), const_spec(b2.shape),
            const_spec(w3s.shape), const_spec(b3s.shape),
            const_spec(w3t.shape), const_spec(b3t.shape),
        ],
        out_specs=(
            pl.BlockSpec((tb, C), lambda i: (i, 0)),
            pl.BlockSpec((tb, 1), lambda i: (i, 0)),
        ),
        compiler_params=pltpu.CompilerParams(
            dimension_semantics=("parallel",)),   # shards across TCs on v7x
    )(x_p, mask, w1, b1, w2, b2, w3s, b3s, w3t, b3t)

    return y[:B], logdet[:B, 0]   # log_det_jacobian has shape [B], as in torch


def init_params(key, input_channel=INPUT_CHANNEL, hidden=HIDDEN):
    """Deterministic synthetic init; Linear weights stored as [in, out]."""
    ks = jax.random.split(key, 6)

    def lin(kw, kb, fan_in, fan_out):
        bound = 1.0 / jnp.sqrt(fan_in)
        w = jax.random.uniform(kw, (fan_in, fan_out), jnp.float32, -bound, bound)
        b = jax.random.uniform(kb, (1, fan_out), jnp.float32, -bound, bound)
        return w, b

    w1, b1 = lin(ks[0], ks[1], input_channel, hidden)
    w2, b2 = lin(ks[2], ks[3], hidden, hidden)
    w3, b3 = lin(ks[4], ks[5], hidden, input_channel * 2)
    return {"w1": w1, "b1": b1, "w2": w2, "b2": b2, "w3": w3, "b3": b3}


def get_mask(mask_type):
    if "01" in mask_type:
        return jnp.array([[0.0, 1.0]], dtype=jnp.float32)
    return jnp.array([[1.0, 0.0]], dtype=jnp.float32)


def reference_forward(x, mask, params):
    """Pure-JAX f32 reference of the PyTorch forward (reverse=False)."""
    x1 = x * mask
    h = x1 @ params["w1"] + params["b1"]
    h = jnp.where(h > 0, h, LEAKY_SLOPE * h)
    h = h @ params["w2"] + params["b2"]
    h = jnp.where(h > 0, h, LEAKY_SLOPE * h)
    st = h @ params["w3"] + params["b3"]
    C = x.shape[1]
    inv = 1.0 - mask
    s = jnp.tanh(st[:, :C] * inv)
    t = st[:, C:] * inv
    y = x1 + inv * (x * jnp.exp(s) + t)
    return y, jnp.sum(s, axis=1)


if __name__ == "__main__":
    key = jax.random.PRNGKey(0)
    k_x, k_p, k_x2 = jax.random.split(key, 3)

    params = init_params(k_p)
    mask = get_mask("01")

    # Small case (single tile).
    B = 8
    x = jax.random.normal(k_x, (B, INPUT_CHANNEL), dtype=jnp.float32)
    y, logdet = coupling_layer_forward(x, mask, params)
    y, logdet = jax.block_until_ready((y, logdet))
    y_ref, logdet_ref = reference_forward(x, mask, params)
    # Kernel uses bf16 MXU matmuls (f32 accumulation) -> loosened tolerance.
    assert jnp.allclose(y, y_ref, atol=2e-2, rtol=2e-2), "y mismatch (small)"
    assert jnp.allclose(logdet, logdet_ref, atol=2e-2, rtol=2e-2), "logdet mismatch (small)"

    # Non-multiple-of-tile batch exercising the grid, padding and resident weights.
    B2 = 600
    x2 = jax.random.normal(k_x2, (B2, INPUT_CHANNEL), dtype=jnp.float32)
    y2, logdet2 = coupling_layer_forward(x2, mask, params, tile_b=256)
    y2, logdet2 = jax.block_until_ready((y2, logdet2))
    y2_ref, logdet2_ref = reference_forward(x2, mask, params)
    assert jnp.allclose(y2, y2_ref, atol=2e-2, rtol=2e-2), "y mismatch (tiled)"
    assert jnp.allclose(logdet2, logdet2_ref, atol=2e-2, rtol=2e-2), "logdet mismatch (tiled)"

    print("KERNEL_OK")
</pallas_src>

<mosaic_0001>
module attributes {stable_mosaic.version = 11 : i64} {
  func.func @_coupling_fwd_kernel(%arg0: i32, %arg1: memref<8x2xf32, #tpu.memory_space<vmem>>, %arg2: memref<1x2xf32, #tpu.memory_space<vmem>>, %arg3: memref<2x256xf32, #tpu.memory_space<vmem>>, %arg4: memref<1x256xf32, #tpu.memory_space<vmem>>, %arg5: memref<256x256xbf16, #tpu.memory_space<vmem>>, %arg6: memref<1x256xf32, #tpu.memory_space<vmem>>, %arg7: memref<256x2xbf16, #tpu.memory_space<vmem>>, %arg8: memref<1x2xf32, #tpu.memory_space<vmem>>, %arg9: memref<256x2xbf16, #tpu.memory_space<vmem>>, %arg10: memref<1x2xf32, #tpu.memory_space<vmem>>, %arg11: memref<8x2xf32, #tpu.memory_space<vmem>>, %arg12: memref<8x1xf32, #tpu.memory_space<vmem>>) attributes {dimension_semantics = [#tpu.dimension_semantics<parallel>], iteration_bounds = array<i64: 1>, scalar_prefetch = 0 : i64, scratch_operands = 0 : i64, tpu.core_type = #tpu.core_type<tc>, window_params = [{transform_indices = @transform_0, window_bounds = array<i64: 8, 2>}, {pipeline_mode = #tpu.pipeline_mode<synchronous>, transform_indices = @transform_1, window_bounds = array<i64: 1, 2>}, {pipeline_mode = #tpu.pipeline_mode<synchronous>, transform_indices = @transform_2, window_bounds = array<i64: 2, 256>}, {pipeline_mode = #tpu.pipeline_mode<synchronous>, transform_indices = @transform_3, window_bounds = array<i64: 1, 256>}, {pipeline_mode = #tpu.pipeline_mode<synchronous>, transform_indices = @transform_4, window_bounds = array<i64: 256, 256>}, {pipeline_mode = #tpu.pipeline_mode<synchronous>, transform_indices = @transform_5, window_bounds = array<i64: 1, 256>}, {pipeline_mode = #tpu.pipeline_mode<synchronous>, transform_indices = @transform_6, window_bounds = array<i64: 256, 2>}, {pipeline_mode = #tpu.pipeline_mode<synchronous>, transform_indices = @transform_7, window_bounds = array<i64: 1, 2>}, {pipeline_mode = #tpu.pipeline_mode<synchronous>, transform_indices = @transform_8, window_bounds = array<i64: 256, 2>}, {pipeline_mode = #tpu.pipeline_mode<synchronous>, transform_indices = @transform_9, window_bounds = array<i64: 1, 2>}, {transform_indices = @transform_10, window_bounds = array<i64: 8, 2>}, {transform_indices = @transform_11, window_bounds = array<i64: 8, 1>}]} {
    %c0 = arith.constant 0 : index
    %c0_0 = arith.constant 0 : index
    %0 = vector.load %arg1[%c0, %c0_0] : memref<8x2xf32, #tpu.memory_space<vmem>>, vector<8x2xf32>
    %c0_1 = arith.constant 0 : index
    %c0_2 = arith.constant 0 : index
    %1 = vector.load %arg2[%c0_1, %c0_2] : memref<1x2xf32, #tpu.memory_space<vmem>>, vector<1x2xf32>
    %cst = arith.constant 1.000000e+00 : f32
    %2 = vector.broadcast %cst : f32 to vector<1x2xf32>
    %3 = arith.subf %2, %1 : vector<1x2xf32>
    %4 = vector.broadcast %1 : vector<1x2xf32> to vector<8x2xf32>
    %5 = arith.mulf %0, %4 : vector<8x2xf32>
    %c0_3 = arith.constant 0 : index
    %c0_4 = arith.constant 0 : index
    %6 = vector.load %arg3[%c0_3, %c0_4] : memref<2x256xf32, #tpu.memory_space<vmem>>, vector<2x256xf32>
    %c0_5 = arith.constant 0 : index
    %c0_6 = arith.constant 0 : index
    %7 = vector.load %arg4[%c0_5, %c0_6] : memref<1x256xf32, #tpu.memory_space<vmem>>, vector<1x256xf32>
    %8 = vector.extract_strided_slice %5 {offsets = [0, 0], sizes = [8, 1], strides = [1, 1]} : vector<8x2xf32> to vector<8x1xf32>
    %9 = vector.extract_strided_slice %6 {offsets = [0, 0], sizes = [1, 256], strides = [1, 1]} : vector<2x256xf32> to vector<1x256xf32>
    %10 = vector.broadcast %8 : vector<8x1xf32> to vector<8x256xf32>
    %11 = vector.broadcast %9 : vector<1x256xf32> to vector<8x256xf32>
    %12 = arith.mulf %10, %11 : vector<8x256xf32>
    %13 = vector.broadcast %7 : vector<1x256xf32> to vector<8x256xf32>
    %14 = arith.addf %13, %12 : vector<8x256xf32>
    %15 = vector.extract_strided_slice %5 {offsets = [0, 1], sizes = [8, 1], strides = [1, 1]} : vector<8x2xf32> to vector<8x1xf32>
    %16 = vector.extract_strided_slice %6 {offsets = [1, 0], sizes = [1, 256], strides = [1, 1]} : vector<2x256xf32> to vector<1x256xf32>
    %17 = vector.broadcast %15 : vector<8x1xf32> to vector<8x256xf32>
    %18 = vector.broadcast %16 : vector<1x256xf32> to vector<8x256xf32>
    %19 = arith.mulf %17, %18 : vector<8x256xf32>
    %20 = arith.addf %14, %19 : vector<8x256xf32>
    %cst_7 = arith.constant 0.000000e+00 : f32
    %21 = vector.broadcast %cst_7 : f32 to vector<8x256xf32>
    %22 = arith.cmpf ogt, %20, %21 : vector<8x256xf32>
    %cst_8 = arith.constant 0.00999999977 : f32
    %23 = vector.broadcast %cst_8 : f32 to vector<8x256xf32>
    %24 = arith.mulf %23, %20 : vector<8x256xf32>
    %25 = arith.select %22, %20, %24 : vector<8x256xi1>, vector<8x256xf32>
    %26 = arith.truncf %25 : vector<8x256xf32> to vector<8x256xbf16>
    %c0_9 = arith.constant 0 : index
    %c0_10 = arith.constant 0 : index
    %27 = vector.load %arg5[%c0_9, %c0_10] : memref<256x256xbf16, #tpu.memory_space<vmem>>, vector<256x256xbf16>
    %cst_11 = arith.constant dense<0.000000e+00> : vector<8x256xf32>
    %28 = tpu.matmul %26, %27, %cst_11 {dimension_numbers = #tpu.dot_dimension_numbers<[1], [0], [0], [1], [0, 0, 1, 1], [], []>} : vector<8x256xbf16>, vector<256x256xbf16>, vector<8x256xf32> -> vector<8x256xf32>
    %c0_12 = arith.constant 0 : index
    %c0_13 = arith.constant 0 : index
    %29 = vector.load %arg6[%c0_12, %c0_13] : memref<1x256xf32, #tpu.memory_space<vmem>>, vector<1x256xf32>
    %30 = vector.broadcast %29 : vector<1x256xf32> to vector<8x256xf32>
    %31 = arith.addf %28, %30 : vector<8x256xf32>
    %cst_14 = arith.constant 0.000000e+00 : f32
    %32 = vector.broadcast %cst_14 : f32 to vector<8x256xf32>
    %33 = arith.cmpf ogt, %31, %32 : vector<8x256xf32>
    %cst_15 = arith.constant 0.00999999977 : f32
    %34 = vector.broadcast %cst_15 : f32 to vector<8x256xf32>
    %35 = arith.mulf %34, %31 : vector<8x256xf32>
    %36 = arith.select %33, %31, %35 : vector<8x256xi1>, vector<8x256xf32>
    %37 = arith.truncf %36 : vector<8x256xf32> to vector<8x256xbf16>
    %c0_16 = arith.constant 0 : index
    %c0_17 = arith.constant 0 : index
    %38 = vector.load %arg7[%c0_16, %c0_17] : memref<256x2xbf16, #tpu.memory_space<vmem>>, vector<256x2xbf16>
    %cst_18 = arith.constant dense<0.000000e+00> : vector<8x2xf32>
    %39 = tpu.matmul %37, %38, %cst_18 {dimension_numbers = #tpu.dot_dimension_numbers<[1], [0], [0], [1], [0, 0, 1, 1], [], []>} : vector<8x256xbf16>, vector<256x2xbf16>, vector<8x2xf32> -> vector<8x2xf32>
    %c0_19 = arith.constant 0 : index
    %c0_20 = arith.constant 0 : index
    %40 = vector.load %arg8[%c0_19, %c0_20] : memref<1x2xf32, #tpu.memory_space<vmem>>, vector<1x2xf32>
    %41 = vector.broadcast %40 : vector<1x2xf32> to vector<8x2xf32>
    %42 = arith.addf %39, %41 : vector<8x2xf32>
    %c0_21 = arith.constant 0 : index
    %c0_22 = arith.constant 0 : index
    %43 = vector.load %arg9[%c0_21, %c0_22] : memref<256x2xbf16, #tpu.memory_space<vmem>>, vector<256x2xbf16>
    %cst_23 = arith.constant dense<0.000000e+00> : vector<8x2xf32>
    %44 = tpu.matmul %37, %43, %cst_23 {dimension_numbers = #tpu.dot_dimension_numbers<[1], [0], [0], [1], [0, 0, 1, 1], [], []>} : vector<8x256xbf16>, vector<256x2xbf16>, vector<8x2xf32> -> vector<8x2xf32>
    %c0_24 = arith.constant 0 : index
    %c0_25 = arith.constant 0 : index
    %45 = vector.load %arg10[%c0_24, %c0_25] : memref<1x2xf32, #tpu.memory_space<vmem>>, vector<1x2xf32>
    %46 = vector.broadcast %45 : vector<1x2xf32> to vector<8x2xf32>
    %47 = arith.addf %44, %46 : vector<8x2xf32>
    %48 = vector.broadcast %3 : vector<1x2xf32> to vector<8x2xf32>
    %49 = arith.mulf %42, %48 : vector<8x2xf32>
    %50 = math.tanh %49 : vector<8x2xf32>
    %51 = vector.broadcast %3 : vector<1x2xf32> to vector<8x2xf32>
    %52 = arith.mulf %47, %51 : vector<8x2xf32>
    %53 = math.exp %50 : vector<8x2xf32>
    %54 = arith.mulf %0, %53 : vector<8x2xf32>
    %55 = arith.addf %54, %52 : vector<8x2xf32>
    %56 = vector.broadcast %3 : vector<1x2xf32> to vector<8x2xf32>
    %57 = arith.mulf %56, %55 : vector<8x2xf32>
    %58 = arith.addf %5, %57 : vector<8x2xf32>
    %c0_26 = arith.constant 0 : index
    %c0_27 = arith.constant 0 : index
    %59 = vector.load %arg11[%c0_26, %c0_27] : memref<8x2xf32, #tpu.memory_space<vmem>>, vector<8x2xf32>
    tpu.vector_store %arg11[%c0_26, %c0_27], %58 {strides = array<i32>} : memref<8x2xf32, #tpu.memory_space<vmem>>, vector<8x2xf32>,
    %60 = vector.extract_strided_slice %50 {offsets = [0, 0], sizes = [8, 1], strides = [1, 1]} : vector<8x2xf32> to vector<8x1xf32>
    %61 = vector.extract_strided_slice %50 {offsets = [0, 1], sizes = [8, 1], strides = [1, 1]} : vector<8x2xf32> to vector<8x1xf32>
    %62 = arith.addf %60, %61 : vector<8x1xf32>
    %c0_28 = arith.constant 0 : index
    %c0_29 = arith.constant 0 : index
    %63 = vector.load %arg12[%c0_28, %c0_29] : memref<8x1xf32, #tpu.memory_space<vmem>>, vector<8x1xf32>
    tpu.vector_store %arg12[%c0_28, %c0_29], %62 {strides = array<i32>} : memref<8x1xf32, #tpu.memory_space<vmem>>, vector<8x1xf32>,
    return
  }
  func.func @transform_0(%arg0: i32) -> (i32, i32) {
    %c0_i32 = arith.constant 0 : i32
    %c0_i32_0 = arith.constant 0 : i32
    return %arg0, %c0_i32 : i32, i32
  }
  func.func @transform_1(%arg0: i32) -> (i32, i32) {
    %c0_i32 = arith.constant 0 : i32
    %c0_i32_0 = arith.constant 0 : i32
    %c0_i32_1 = arith.constant 0 : i32
    return %c0_i32, %c0_i32_0 : i32, i32
  }
  func.func @transform_2(%arg0: i32) -> (i32, i32) {
    %c0_i32 = arith.constant 0 : i32
    %c0_i32_0 = arith.constant 0 : i32
    %c0_i32_1 = arith.constant 0 : i32
    return %c0_i32, %c0_i32_0 : i32, i32
  }
  func.func @transform_3(%arg0: i32) -> (i32, i32) {
    %c0_i32 = arith.constant 0 : i32
    %c0_i32_0 = arith.constant 0 : i32
    %c0_i32_1 = arith.constant 0 : i32
    return %c0_i32, %c0_i32_0 : i32, i32
  }
  func.func @transform_4(%arg0: i32) -> (i32, i32) {
    %c0_i32 = arith.constant 0 : i32
    %c0_i32_0 = arith.constant 0 : i32
    %c0_i32_1 = arith.constant 0 : i32
    return %c0_i32, %c0_i32_0 : i32, i32
  }
  func.func @transform_5(%arg0: i32) -> (i32, i32) {
    %c0_i32 = arith.constant 0 : i32
    %c0_i32_0 = arith.constant 0 : i32
    %c0_i32_1 = arith.constant 0 : i32
    return %c0_i32, %c0_i32_0 : i32, i32
  }
  func.func @transform_6(%arg0: i32) -> (i32, i32) {
    %c0_i32 = arith.constant 0 : i32
    %c0_i32_0 = arith.constant 0 : i32
    %c0_i32_1 = arith.constant 0 : i32
    return %c0_i32, %c0_i32_0 : i32, i32
  }
  func.func @transform_7(%arg0: i32) -> (i32, i32) {
    %c0_i32 = arith.constant 0 : i32
    %c0_i32_0 = arith.constant 0 : i32
    %c0_i32_1 = arith.constant 0 : i32
    return %c0_i32, %c0_i32_0 : i32, i32
  }
  func.func @transform_8(%arg0: i32) -> (i32, i32) {
    %c0_i32 = arith.constant 0 : i32
    %c0_i32_0 = arith.constant 0 : i32
    %c0_i32_1 = arith.constant 0 : i32
    return %c0_i32, %c0_i32_0 : i32, i32
  }
  func.func @transform_9(%arg0: i32) -> (i32, i32) {
    %c0_i32 = arith.constant 0 : i32
    %c0_i32_0 = arith.constant 0 : i32
    %c0_i32_1 = arith.constant 0 : i32
    return %c0_i32, %c0_i32_0 : i32, i32
  }
  func.func @transform_10(%arg0: i32) -> (i32, i32) {
    %c0_i32 = arith.constant 0 : i32
    %c0_i32_0 = arith.constant 0 : i32
    return %arg0, %c0_i32 : i32, i32
  }
  func.func @transform_11(%arg0: i32) -> (i32, i32) {
    %c0_i32 = arith.constant 0 : i32
    %c0_i32_0 = arith.constant 0 : i32
    return %arg0, %c0_i32 : i32, i32
  }
}

</mosaic_0001>

<llo_original>
// kernel: tpu_custom_call.1
$region0: #{tpu_custom_call.1}
  #allocation0 [shape = 'u32[]', space=smem, size = 0x4, offset = 0x4, fixed_abs, tag = 'smem constant byte address 0x4 - core index']
  #allocation1 [shape = 'u32[144,128]{1,0:T(1,128)}', space=vmem, size = 0x12000, scoped, tag = 'internal scratch']
  %s0 = inlined_call_operand.vmem [shape: f32[8,2], index: 0, kind: input, shape index: {}]
  %s1 = inlined_call_operand.vmem [shape: f32[1,2], index: 1, kind: input, shape index: {}]
  %s2 = inlined_call_operand.vmem [shape: f32[2,256], index: 2, kind: input, shape index: {}]
  %s3 = inlined_call_operand.vmem [shape: f32[1,256], index: 3, kind: input, shape index: {}]
  %s4 = inlined_call_operand.vmem [shape: bf16[256,256], index: 4, kind: input, shape index: {}]
  %s5 = inlined_call_operand.vmem [shape: f32[1,256], index: 5, kind: input, shape index: {}]
  %s6 = inlined_call_operand.vmem [shape: bf16[256,2], index: 6, kind: input, shape index: {}]
  %s7 = inlined_call_operand.vmem [shape: f32[1,2], index: 7, kind: input, shape index: {}]
  %s8 = inlined_call_operand.vmem [shape: bf16[256,2], index: 8, kind: input, shape index: {}]
  %s9 = inlined_call_operand.vmem [shape: f32[1,2], index: 9, kind: input, shape index: {}]
  %s10 = inlined_call_operand.vmem [shape: f32[8,2], index: 10, kind: output, shape index: {0}]
  %s11 = inlined_call_operand.vmem [shape: f32[8,1], index: 11, kind: output, shape index: {1}]
  %12 = xla_tuple %s10, %s11
  %s13 = sld [smem:[#allocation0]]
  $region58: #{tpu_custom_call.1} parent=0
    _
  %s15 = ssub.s32 1, %s13
  %s16 = scalar_select 0, %s15, %s13
  // Predicated region
  $region2: #{tpu_custom_call.1} parent=0 // pred_check
    _
  $region3: #{tpu_custom_call.1} parent=0 // pred_check_branch
    %18 = sbr.rel (0) target = $region5
  $region4: #{tpu_custom_call.1} parent=0 // pred_region
    _
  $region5: #{tpu_custom_call.1} parent=0 // pred_fallthru
    _
  // Predicated region
  $region6: #{tpu_custom_call.1} parent=0 // pred_check
    _
  $region7: #{tpu_custom_call.1} parent=0 // pred_check_branch
    %20 = sbr.rel (0) target = $region9
  $region8: #{tpu_custom_call.1} parent=0 // pred_region
    _
  $region9: #{tpu_custom_call.1} parent=0 // pred_fallthru
    _
  // Predicated region
  $region10: #{tpu_custom_call.1} parent=0 // pred_check
    _
  $region11: #{tpu_custom_call.1} parent=0 // pred_check_branch
    %22 = sbr.rel (0) target = $region13
  $region12: #{tpu_custom_call.1} parent=0 // pred_region
    _
  $region13: #{tpu_custom_call.1} parent=0 // pred_fallthru
    _
  // Predicated region
  $region14: #{tpu_custom_call.1} parent=0 // pred_check
    _
  $region15: #{tpu_custom_call.1} parent=0 // pred_check_branch
    %24 = sbr.rel (0) target = $region17
  $region16: #{tpu_custom_call.1} parent=0 // pred_region
    _
  $region17: #{tpu_custom_call.1} parent=0 // pred_fallthru
    _
  // Predicated region
  $region18: #{tpu_custom_call.1} parent=0 // pred_check
    _
  $region19: #{tpu_custom_call.1} parent=0 // pred_check_branch
    %26 = sbr.rel (0) target = $region21
  $region20: #{tpu_custom_call.1} parent=0 // pred_region
    _
  $region21: #{tpu_custom_call.1} parent=0 // pred_fallthru
    _
  // Predicated region
  $region22: #{tpu_custom_call.1} parent=0 // pred_check
    _
  $region23: #{tpu_custom_call.1} parent=0 // pred_check_branch
    %28 = sbr.rel (0) target = $region25
  $region24: #{tpu_custom_call.1} parent=0 // pred_region
    _
  $region25: #{tpu_custom_call.1} parent=0 // pred_fallthru
    _
  // Predicated region
  $region26: #{tpu_custom_call.1} parent=0 // pred_check
    _
  $region27: #{tpu_custom_call.1} parent=0 // pred_check_branch
    %30 = sbr.rel (0) target = $region29
  $region28: #{tpu_custom_call.1} parent=0 // pred_region
    _
  $region29: #{tpu_custom_call.1} parent=0 // pred_fallthru
    _
  // Predicated region
  $region30: #{tpu_custom_call.1} parent=0 // pred_check
    _
  $region31: #{tpu_custom_call.1} parent=0 // pred_check_branch
    %32 = sbr.rel (0) target = $region33
  $region32: #{tpu_custom_call.1} parent=0 // pred_region
    _
  $region33: #{tpu_custom_call.1} parent=0 // pred_fallthru
    _
  // Predicated region
  $region34: #{tpu_custom_call.1} parent=0 // pred_check
    _
  $region35: #{tpu_custom_call.1} parent=0 // pred_check_branch
    %34 = sbr.rel (0) target = $region37
  $region36: #{tpu_custom_call.1} parent=0 // pred_region
    _
  $region37: #{tpu_custom_call.1} parent=0 // pred_fallthru
    _
  // Predicated region
  $region38: #{tpu_custom_call.1} parent=0 // pred_check
    _
  $region39: #{tpu_custom_call.1} parent=0 // pred_check_branch
    %36 = sbr.rel (0) target = $region41
  $region40: #{tpu_custom_call.1} parent=0 // pred_region
    _
  $region41: #{tpu_custom_call.1} parent=0 // pred_fallthru
    _
  %v38 = vld [vmem:[%s0] sm:$0xff]
  %v39 = vld [vmem:[%s1] sm:$0x1]
  %v40 = vsub.f32 1.0, %v39
  %v42 = vlaneseq
  %v43 = vshrl.u32 %v42, 7
  %v44 = vsub.s32 0, %v43
  %v45 = vrot.slane %v39, %v44
  %v47 = vmul.f32 %v38, %v45
  %v48 = vld [vmem:[%s2] sm:$0xf]
  %v49 = vld [vmem:[%s3] sm:$0x3]
  %51 = vset.pattern.permute.xlu0 0
  %52 = vperm.xlu0 %51, %v47
  %v53 = vpop.permute.xlu0 %52
  %v56 = vlaneseq
  %v57 = vshrl.u32 %v56, 7
  %v58 = vsub.s32 0, %v57
  %v59 = vrot.slane %v48, %v58
  %v60 = vlaneseq
  %v61 = vshrl.u32 %v60, 7
  %v62 = vsub.s32 2, %v61
  %v63 = vrot.slane %v48, %v62
  %v66 = vlaneseq
  %v67 = vshrl.u32 %v66, 7
  %v68 = vsub.s32 0, %v67
  %v69 = vrot.slane %v59, %v68
  %v70 = vlaneseq
  %v71 = vshrl.u32 %v70, 7
  %v72 = vsub.s32 0, %v71
  %v73 = vrot.slane %v63, %v72
  %v74 = vmul.f32 %v53, %v69
  %v75 = vmul.f32 %v53, %v73
  %v77 = vlaneseq
  %v78 = vshrl.u32 %v77, 7
  %v79 = vsub.s32 0, %v78
  %v80 = vrot.slane %v49, %v79
  %v81 = vlaneseq
  %v82 = vshrl.u32 %v81, 7
  %v83 = vsub.s32 1, %v82
  %v84 = vrot.slane %v49, %v83
  %v87 = vadd.f32 %v80, %v74
  %v88 = vadd.f32 %v84, %v75
  %89 = vset.pattern.permute.xlu0 1
  %90 = vperm.xlu0 %89, %v47
  %v91 = vpop.permute.xlu0 %90
  %v93 = vlaneseq
  %v94 = vshrl.u32 %v93, 7
  %v95 = vsub.s32 1, %v94
  %v96 = vrot.slane %v48, %v95
  %v97 = vlaneseq
  %v98 = vshrl.u32 %v97, 7
  %v99 = vsub.s32 3, %v98
  %v100 = vrot.slane %v48, %v99
  %v103 = vlaneseq
  %v104 = vshrl.u32 %v103, 7
  %v105 = vsub.s32 1, %v104
  %v106 = vrot.slane %v96, %v105
  %v107 = vlaneseq
  %v108 = vshrl.u32 %v107, 7
  %v109 = vsub.s32 1, %v108
  %v110 = vrot.slane %v100, %v109
  %v111 = vmul.f32 %v91, %v106
  %v112 = vmul.f32 %v91, %v110
  %v113 = vadd.f32 %v87, %v111
  %v114 = vadd.f32 %v88, %v112
  %vm115 = vcmp.gt.f32.partialorder %v113, 0.0
  %vm116 = vcmp.gt.f32.partialorder %v114, 0.0
  %v117 = vmul.f32 %v113, 0.01
  %v118 = vmul.f32 %v114, 0.01
  %v119 = vsel %vm115, %v113, %v117
  %v120 = vsel %vm116, %v114, %v118
  %v121 = vpack.c.bf16 %v119, %v119
  %v122 = vpack.c.bf16 %v120, %v120
  %v123 = vld [vmem:[%s4] sm:$0xff]
  %v124 = vld [vmem:[%s4 + $0x8] sm:$0xff]
  %v125 = vld [vmem:[%s4 + $0x10] sm:$0xff]
  %v126 = vld [vmem:[%s4 + $0x18] sm:$0xff]
  %v127 = vld [vmem:[%s4 + $0x20] sm:$0xff]
  %v128 = vld [vmem:[%s4 + $0x28] sm:$0xff]
  %v129 = vld [vmem:[%s4 + $0x30] sm:$0xff]
  %v130 = vld [vmem:[%s4 + $0x38] sm:$0xff]
  %v131 = vld [vmem:[%s4 + $0x40] sm:$0xff]
  %v132 = vld [vmem:[%s4 + $0x48] sm:$0xff]
  %v133 = vld [vmem:[%s4 + $0x50] sm:$0xff]
  %v134 = vld [vmem:[%s4 + $0x58] sm:$0xff]
  %v135 = vld [vmem:[%s4 + $0x60] sm:$0xff]
  %v136 = vld [vmem:[%s4 + $0x68] sm:$0xff]
  %v137 = vld [vmem:[%s4 + $0x70] sm:$0xff]
  %v138 = vld [vmem:[%s4 + $0x78] sm:$0xff]
  %v139 = vld [vmem:[%s4 + $0x80] sm:$0xff]
  %v140 = vld [vmem:[%s4 + $0x88] sm:$0xff]
  %v141 = vld [vmem:[%s4 + $0x90] sm:$0xff]
  %v142 = vld [vmem:[%s4 + $0x98] sm:$0xff]
  %v143 = vld [vmem:[%s4 + $0xa0] sm:$0xff]
  %v144 = vld [vmem:[%s4 + $0xa8] sm:$0xff]
  %v145 = vld [vmem:[%s4 + $0xb0] sm:$0xff]
  %v146 = vld [vmem:[%s4 + $0xb8] sm:$0xff]
  %v147 = vld [vmem:[%s4 + $0xc0] sm:$0xff]
  %v148 = vld [vmem:[%s4 + $0xc8] sm:$0xff]
  %v149 = vld [vmem:[%s4 + $0xd0] sm:$0xff]
  %v150 = vld [vmem:[%s4 + $0xd8] sm:$0xff]
  %v151 = vld [vmem:[%s4 + $0xe0] sm:$0xff]
  %v152 = vld [vmem:[%s4 + $0xe8] sm:$0xff]
  %v153 = vld [vmem:[%s4 + $0xf0] sm:$0xff]
  %v154 = vld [vmem:[%s4 + $0xf8] sm:$0xff]
  %v155 = vld [vmem:[%s5] sm:$0x3]
  %v157 = vlaneseq
  %v158 = vshrl.u32 %v157, 7
  %v159 = vsub.s32 0, %v158
  %v160 = vrot.slane %v155, %v159
  %v161 = vlaneseq
  %v162 = vshrl.u32 %v161, 7
  %v163 = vsub.s32 1, %v162
  %v164 = vrot.slane %v155, %v163
  %v199 = vunpack.c.l.b16 %v123
  %v200 = vunpack.c.h.b16 %v123
  %v201 = vunpack.c.l.b16 %v124
  %v202 = vunpack.c.h.b16 %v124
  %v203 = vunpack.c.l.b16 %v125
  %v204 = vunpack.c.h.b16 %v125
  %v205 = vunpack.c.l.b16 %v126
  %v206 = vunpack.c.h.b16 %v126
  %v207 = vunpack.c.l.b16 %v127
  %v208 = vunpack.c.h.b16 %v127
  %v209 = vunpack.c.l.b16 %v128
  %v210 = vunpack.c.h.b16 %v128
  %v211 = vunpack.c.l.b16 %v129
  %v212 = vunpack.c.h.b16 %v129
  %v213 = vunpack.c.l.b16 %v130
  %v214 = vunpack.c.h.b16 %v130
  %v215 = vunpack.c.l.b16 %v131
  %v216 = vunpack.c.h.b16 %v131
  %v217 = vunpack.c.l.b16 %v132
  %v218 = vunpack.c.h.b16 %v132
  %v219 = vunpack.c.l.b16 %v133
  %v220 = vunpack.c.h.b16 %v133
  %v221 = vunpack.c.l.b16 %v134
  %v222 = vunpack.c.h.b16 %v134
  %v223 = vunpack.c.l.b16 %v135
  %v224 = vunpack.c.h.b16 %v135
  %v225 = vunpack.c.l.b16 %v136
  %v226 = vunpack.c.h.b16 %v136
  %v227 = vunpack.c.l.b16 %v137
  %v228 = vunpack.c.h.b16 %v137
  %v229 = vunpack.c.l.b16 %v138
  %v230 = vunpack.c.h.b16 %v138
  %v231 = vunpack.c.l.b16 %v139
  %v232 = vunpack.c.h.b16 %v139
  %v233 = vunpack.c.l.b16 %v140
  %v234 = vunpack.c.h.b16 %v140
  %v235 = vunpack.c.l.b16 %v141
  %v236 = vunpack.c.h.b16 %v141
  %v237 = vunpack.c.l.b16 %v142
  %v238 = vunpack.c.h.b16 %v142
  %v239 = vunpack.c.l.b16 %v143
  %v240 = vunpack.c.h.b16 %v143
  %v241 = vunpack.c.l.b16 %v144
  %v242 = vunpack.c.h.b16 %v144
  %v243 = vunpack.c.l.b16 %v145
  %v244 = vunpack.c.h.b16 %v145
  %v245 = vunpack.c.l.b16 %v146
  %v246 = vunpack.c.h.b16 %v146
  %v247 = vunpack.c.l.b16 %v147
  %v248 = vunpack.c.h.b16 %v147
  %v249 = vunpack.c.l.b16 %v148
  %v250 = vunpack.c.h.b16 %v148
  %v251 = vunpack.c.l.b16 %v149
  %v252 = vunpack.c.h.b16 %v149
  %v253 = vunpack.c.l.b16 %v150
  %v254 = vunpack.c.h.b16 %v150
  %v255 = vunpack.c.l.b16 %v151
  %v256 = vunpack.c.h.b16 %v151
  %v257 = vunpack.c.l.b16 %v152
  %v258 = vunpack.c.h.b16 %v152
  %v259 = vunpack.c.l.b16 %v153
  %v260 = vunpack.c.h.b16 %v153
  %v261 = vunpack.c.l.b16 %v154
  %v262 = vunpack.c.h.b16 %v154
  %v263 = vpack.c.b16 %v201, %v199
  %v264 = vpack.c.b16 %v202, %v200
  %v265 = vpack.c.b16 %v205, %v203
  %v266 = vpack.c.b16 %v206, %v204
  %v267 = vpack.c.b16 %v209, %v207
  %v268 = vpack.c.b16 %v210, %v208
  %v269 = vpack.c.b16 %v213, %v211
  %v270 = vpack.c.b16 %v214, %v212
  %v271 = vpack.c.b16 %v217, %v215
  %v272 = vpack.c.b16 %v218, %v216
  %v273 = vpack.c.b16 %v221, %v219
  %v274 = vpack.c.b16 %v222, %v220
  %v275 = vpack.c.b16 %v225, %v223
  %v276 = vpack.c.b16 %v226, %v224
  %v277 = vpack.c.b16 %v229, %v227
  %v278 = vpack.c.b16 %v230, %v228
  %v279 = vpack.c.b16 %v233, %v231
  %v280 = vpack.c.b16 %v234, %v232
  %v281 = vpack.c.b16 %v237, %v235
  %v282 = vpack.c.b16 %v238, %v236
  %v283 = vpack.c.b16 %v241, %v239
  %v284 = vpack.c.b16 %v242, %v240
  %v285 = vpack.c.b16 %v245, %v243
  %v286 = vpack.c.b16 %v246, %v244
  %v287 = vpack.c.b16 %v249, %v247
  %v288 = vpack.c.b16 %v250, %v248
  %v289 = vpack.c.b16 %v253, %v251
  %v290 = vpack.c.b16 %v254, %v252
  %v291 = vpack.c.b16 %v257, %v255
  %v292 = vpack.c.b16 %v258, %v256
  %v293 = vpack.c.b16 %v261, %v259
  %v294 = vpack.c.b16 %v262, %v260
  %327 = vmatprep.subr.bf16.mxu0 %v278
  %328 = vmatpush1.bf16.msra.mxu0 %v277
  %329 = vmatprep.subr.bf16.mxu0 %v276
  %330 = vmatpush1.bf16.msra.mxu0 %v275
  %331 = vmatprep.subr.bf16.mxu0 %v274
  %332 = vmatpush1.bf16.msra.mxu0 %v273
  %333 = vmatprep.subr.bf16.mxu0 %v272
  %334 = vmatpush1.bf16.msra.mxu0 %v271
  %335 = vmatprep.subr.bf16.mxu0 %v270
  %336 = vmatpush1.bf16.msra.mxu0 %v269
  %337 = vmatprep.subr.bf16.mxu0 %v268
  %338 = vmatpush1.bf16.msra.mxu0 %v267
  %339 = vmatprep.subr.bf16.mxu0 %v266
  %340 = vmatpush1.bf16.msra.mxu0 %v265
  %341 = vmatprep.subr.bf16.mxu0 %v264
  %342 = vmatpush1.bf16.msra.mxu0 %v263
  %343 = vmatprep.subr.bf16.mxu0 %v294
  %344 = vmatpush2.bf16.msra.mxu0 %v293
  %345 = vmatprep.subr.bf16.mxu0 %v292
  %346 = vmatpush2.bf16.msra.mxu0 %v291
  %347 = vmatprep.subr.bf16.mxu0 %v290
  %348 = vmatpush2.bf16.msra.mxu0 %v289
  %349 = vmatprep.subr.bf16.mxu0 %v288
  %350 = vmatpush2.bf16.msra.mxu0 %v287
  %351 = vmatprep.subr.bf16.mxu0 %v286
  %352 = vmatpush2.bf16.msra.mxu0 %v285
  %353 = vmatprep.subr.bf16.mxu0 %v284
  %354 = vmatpush2.bf16.msra.mxu0 %v283
  %355 = vmatprep.subr.bf16.mxu0 %v282
  %356 = vmatpush2.bf16.msra.mxu0 %v281
  %357 = vmatprep.subr.bf16.mxu0 %v280
  %358 = vmatpush2.bf16.msra.mxu0 %v279
  %359 = vmatprep.mubr.bf16.mxu0 %v122
  %360 = vmatmul.mubr.bf16.gmra.mxu0 %v121
  %v361 = vpop.f32.mrf.mxu0
  %v362 = vadd.f32 %v160, %v361
  %v363 = vpop.f32.mrf.mxu0
  %v364 = vadd.f32 %v164, %v363
  %v365 = vpop.f32.mrf.mxu0
  %v366 = vpop.f32.mrf.mxu0
  %367 = vdwg.mxu0
  %vm368 = vcmp.gt.f32.partialorder %v362, 0.0
  %vm369 = vcmp.gt.f32.partialorder %v364, 0.0
  %v370 = vmul.f32 %v362, 0.01
  %v371 = vmul.f32 %v364, 0.01
  %v372 = vsel %vm368, %v362, %v370
  %v373 = vsel %vm369, %v364, %v371
  %v374 = vpack.c.bf16 %v372, %v372
  %v375 = vpack.c.bf16 %v373, %v373
  %v376 = vld [vmem:[%s6] sm:$0xf]
  %v377 = vld [vmem:[%s6 + $0x4] sm:$0xf]
  %v378 = vld [vmem:[%s6 + $0x8] sm:$0xf]
  %v379 = vld [vmem:[%s6 + $0xc] sm:$0xf]
  %v380 = vld [vmem:[%s6 + $0x10] sm:$0xf]
  %v381 = vld [vmem:[%s6 + $0x14] sm:$0xf]
  %v382 = vld [vmem:[%s6 + $0x18] sm:$0xf]
  %v383 = vld [vmem:[%s6 + $0x1c] sm:$0xf]
  %v384 = vld [vmem:[%s6 + $0x20] sm:$0xf]
  %v385 = vld [vmem:[%s6 + $0x24] sm:$0xf]
  %v386 = vld [vmem:[%s6 + $0x28] sm:$0xf]
  %v387 = vld [vmem:[%s6 + $0x2c] sm:$0xf]
  %v388 = vld [vmem:[%s6 + $0x30] sm:$0xf]
  %v389 = vld [vmem:[%s6 + $0x34] sm:$0xf]
  %v390 = vld [vmem:[%s6 + $0x38] sm:$0xf]
  %v391 = vld [vmem:[%s6 + $0x3c] sm:$0xf]
  %v392 = vld [vmem:[%s6 + $0x40] sm:$0xf]
  %v393 = vld [vmem:[%s6 + $0x44] sm:$0xf]
  %v394 = vld [vmem:[%s6 + $0x48] sm:$0xf]
  %v395 = vld [vmem:[%s6 + $0x4c] sm:$0xf]
  %v396 = vld [vmem:[%s6 + $0x50] sm:$0xf]
  %v397 = vld [vmem:[%s6 + $0x54] sm:$0xf]
  %v398 = vld [vmem:[%s6 + $0x58] sm:$0xf]
  %v399 = vld [vmem:[%s6 + $0x5c] sm:$0xf]
  %v400 = vld [vmem:[%s6 + $0x60] sm:$0xf]
  %v401 = vld [vmem:[%s6 + $0x64] sm:$0xf]
  %v402 = vld [vmem:[%s6 + $0x68] sm:$0xf]
  %v403 = vld [vmem:[%s6 + $0x6c] sm:$0xf]
  %v404 = vld [vmem:[%s6 + $0x70] sm:$0xf]
  %v405 = vld [vmem:[%s6 + $0x74] sm:$0xf]
  %v406 = vld [vmem:[%s6 + $0x78] sm:$0xf]
  %v407 = vld [vmem:[%s6 + $0x7c] sm:$0xf]
  %v408 = vld [vmem:[%s7] sm:$0x1]
  %v410 = vlaneseq
  %v411 = vshrl.u32 %v410, 7
  %v412 = vsub.s32 0, %v411
  %v413 = vrot.slane %v408, %v412
  %v447 = vunpack.c.l.b16 %v376
  %v448 = vunpack.c.l.b16 %v377
  %v449 = vunpack.c.l.b16 %v378
  %v450 = vunpack.c.l.b16 %v379
  %v451 = vunpack.c.l.b16 %v380
  %v452 = vunpack.c.l.b16 %v381
  %v453 = vunpack.c.l.b16 %v382
  %v454 = vunpack.c.l.b16 %v383
  %v455 = vunpack.c.l.b16 %v384
  %v456 = vunpack.c.l.b16 %v385
  %v457 = vunpack.c.l.b16 %v386
  %v458 = vunpack.c.l.b16 %v387
  %v459 = vunpack.c.l.b16 %v388
  %v460 = vunpack.c.l.b16 %v389
  %v461 = vunpack.c.l.b16 %v390
  %v462 = vunpack.c.l.b16 %v391
  %v463 = vunpack.c.l.b16 %v392
  %v464 = vunpack.c.l.b16 %v393
  %v465 = vunpack.c.l.b16 %v394
  %v466 = vunpack.c.l.b16 %v395
  %v467 = vunpack.c.l.b16 %v396
  %v468 = vunpack.c.l.b16 %v397
  %v469 = vunpack.c.l.b16 %v398
  %v470 = vunpack.c.l.b16 %v399
  %v471 = vunpack.c.l.b16 %v400
  %v472 = vunpack.c.l.b16 %v401
  %v473 = vunpack.c.l.b16 %v402
  %v474 = vunpack.c.l.b16 %v403
  %v475 = vunpack.c.l.b16 %v404
  %v476 = vunpack.c.l.b16 %v405
  %v477 = vunpack.c.l.b16 %v406
  %v478 = vunpack.c.l.b16 %v407
  %v479 = vpack.c.b16 %v448, %v447
  %v480 = vpack.c.b16 %v450, %v449
  %v481 = vpack.c.b16 %v452, %v451
  %v482 = vpack.c.b16 %v454, %v453
  %v483 = vpack.c.b16 %v456, %v455
  %v484 = vpack.c.b16 %v458, %v457
  %v485 = vpack.c.b16 %v460, %v459
  %v486 = vpack.c.b16 %v462, %v461
  %v487 = vpack.c.b16 %v464, %v463
  %v488 = vpack.c.b16 %v466, %v465
  %v489 = vpack.c.b16 %v468, %v467
  %v490 = vpack.c.b16 %v470, %v469
  %v491 = vpack.c.b16 %v472, %v471
  %v492 = vpack.c.b16 %v474, %v473
  %v493 = vpack.c.b16 %v476, %v475
  %v494 = vpack.c.b16 %v478, %v477
  %511 = vmatprep.subr.bf16.mxu0 0
  %512 = vmatpush1.bf16.msra.mxu0 %v486
  %513 = vmatprep.subr.bf16.mxu0 0
  %514 = vmatpush1.bf16.msra.mxu0 %v485
  %515 = vmatprep.subr.bf16.mxu0 0
  %516 = vmatpush1.bf16.msra.mxu0 %v484
  %517 = vmatprep.subr.bf16.mxu0 0
  %518 = vmatpush1.bf16.msra.mxu0 %v483
  %519 = vmatprep.subr.bf16.mxu0 0
  %520 = vmatpush1.bf16.msra.mxu0 %v482
  %521 = vmatprep.subr.bf16.mxu0 0
  %522 = vmatpush1.bf16.msra.mxu0 %v481
  %523 = vmatprep.subr.bf16.mxu0 0
  %524 = vmatpush1.bf16.msra.mxu0 %v480
  %525 = vmatprep.subr.bf16.mxu0 0
  %526 = vmatpush1.bf16.msra.mxu0 %v479
  %527 = vmatprep.subr.bf16.mxu0 0
  %528 = vmatpush2.bf16.msra.mxu0 %v494
  %529 = vmatprep.subr.bf16.mxu0 0
  %530 = vmatpush2.bf16.msra.mxu0 %v493
  %531 = vmatprep.subr.bf16.mxu0 0
  %532 = vmatpush2.bf16.msra.mxu0 %v492
  %533 = vmatprep.subr.bf16.mxu0 0
  %534 = vmatpush2.bf16.msra.mxu0 %v491
  %535 = vmatprep.subr.bf16.mxu0 0
  %536 = vmatpush2.bf16.msra.mxu0 %v490
  %537 = vmatprep.subr.bf16.mxu0 0
  %538 = vmatpush2.bf16.msra.mxu0 %v489
  %539 = vmatprep.subr.bf16.mxu0 0
  %540 = vmatpush2.bf16.msra.mxu0 %v488
  %541 = vmatprep.subr.bf16.mxu0 0
  %542 = vmatpush2.bf16.msra.mxu0 %v487
  %543 = vmatprep.mubr.bf16.mxu0 %v375
  %544 = vmatmul.mubr.bf16.gmra.mxu0 %v374
  %v545 = vpop.f32.mrf.mxu0
  %v546 = vadd.f32 %v413, %v545
  %v547 = vpop.f32.mrf.mxu0
  %v548 = vpop.f32.mrf.mxu0
  %v549 = vpop.f32.mrf.mxu0
  %550 = vdwg.mxu0
  %v551 = vld [vmem:[%s8] sm:$0xf]
  %v552 = vld [vmem:[%s8 + $0x4] sm:$0xf]
  %v553 = vld [vmem:[%s8 + $0x8] sm:$0xf]
  %v554 = vld [vmem:[%s8 + $0xc] sm:$0xf]
  %v555 = vld [vmem:[%s8 + $0x10] sm:$0xf]
  %v556 = vld [vmem:[%s8 + $0x14] sm:$0xf]
  %v557 = vld [vmem:[%s8 + $0x18] sm:$0xf]
  %v558 = vld [vmem:[%s8 + $0x1c] sm:$0xf]
  %v559 = vld [vmem:[%s8 + $0x20] sm:$0xf]
  %v560 = vld [vmem:[%s8 + $0x24] sm:$0xf]
  %v561 = vld [vmem:[%s8 + $0x28] sm:$0xf]
  %v562 = vld [vmem:[%s8 + $0x2c] sm:$0xf]
  %v563 = vld [vmem:[%s8 + $0x30] sm:$0xf]
  %v564 = vld [vmem:[%s8 + $0x34] sm:$0xf]
  %v565 = vld [vmem:[%s8 + $0x38] sm:$0xf]
  %v566 = vld [vmem:[%s8 + $0x3c] sm:$0xf]
  %v567 = vld [vmem:[%s8 + $0x40] sm:$0xf]
  %v568 = vld [vmem:[%s8 + $0x44] sm:$0xf]
  %v569 = vld [vmem:[%s8 + $0x48] sm:$0xf]
  %v570 = vld [vmem:[%s8 + $0x4c] sm:$0xf]
  %v571 = vld [vmem:[%s8 + $0x50] sm:$0xf]
  %v572 = vld [vmem:[%s8 + $0x54] sm:$0xf]
  %v573 = vld [vmem:[%s8 + $0x58] sm:$0xf]
  %v574 = vld [vmem:[%s8 + $0x5c] sm:$0xf]
  %v575 = vld [vmem:[%s8 + $0x60] sm:$0xf]
  %v576 = vld [vmem:[%s8 + $0x64] sm:$0xf]
  %v577 = vld [vmem:[%s8 + $0x68] sm:$0xf]
  %v578 = vld [vmem:[%s8 + $0x6c] sm:$0xf]
  %v579 = vld [vmem:[%s8 + $0x70] sm:$0xf]
  %v580 = vld [vmem:[%s8 + $0x74] sm:$0xf]
  %v581 = vld [vmem:[%s8 + $0x78] sm:$0xf]
  %v582 = vld [vmem:[%s8 + $0x7c] sm:$0xf]
  %v583 = vld [vmem:[%s9] sm:$0x1]
  %v585 = vlaneseq
  %v586 = vshrl.u32 %v585, 7
  %v587 = vsub.s32 0, %v586
  %v588 = vrot.slane %v583, %v587
  %v622 = vunpack.c.l.b16 %v551
  %v623 = vunpack.c.l.b16 %v552
  %v624 = vunpack.c.l.b16 %v553
  %v625 = vunpack.c.l.b16 %v554
  %v626 = vunpack.c.l.b16 %v555
  %v627 = vunpack.c.l.b16 %v556
  %v628 = vunpack.c.l.b16 %v557
  %v629 = vunpack.c.l.b16 %v558
  %v630 = vunpack.c.l.b16 %v559
  %v631 = vunpack.c.l.b16 %v560
  %v632 = vunpack.c.l.b16 %v561
  %v633 = vunpack.c.l.b16 %v562
  %v634 = vunpack.c.l.b16 %v563
  %v635 = vunpack.c.l.b16 %v564
  %v636 = vunpack.c.l.b16 %v565
  %v637 = vunpack.c.l.b16 %v566
  %v638 = vunpack.c.l.b16 %v567
  %v639 = vunpack.c.l.b16 %v568
  %v640 = vunpack.c.l.b16 %v569
  %v641 = vunpack.c.l.b16 %v570
  %v642 = vunpack.c.l.b16 %v571
  %v643 = vunpack.c.l.b16 %v572
  %v644 = vunpack.c.l.b16 %v573
  %v645 = vunpack.c.l.b16 %v574
  %v646 = vunpack.c.l.b16 %v575
  %v647 = vunpack.c.l.b16 %v576
  %v648 = vunpack.c.l.b16 %v577
  %v649 = vunpack.c.l.b16 %v578
  %v650 = vunpack.c.l.b16 %v579
  %v651 = vunpack.c.l.b16 %v580
  %v652 = vunpack.c.l.b16 %v581
  %v653 = vunpack.c.l.b16 %v582
  %v654 = vpack.c.b16 %v623, %v622
  %v655 = vpack.c.b16 %v625, %v624
  %v656 = vpack.c.b16 %v627, %v626
  %v657 = vpack.c.b16 %v629, %v628
  %v658 = vpack.c.b16 %v631, %v630
  %v659 = vpack.c.b16 %v633, %v632
  %v660 = vpack.c.b16 %v635, %v634
  %v661 = vpack.c.b16 %v637, %v636
  %v662 = vpack.c.b16 %v639, %v638
  %v663 = vpack.c.b16 %v641, %v640
  %v664 = vpack.c.b16 %v643, %v642
  %v665 = vpack.c.b16 %v645, %v644
  %v666 = vpack.c.b16 %v647, %v646
  %v667 = vpack.c.b16 %v649, %v648
  %v668 = vpack.c.b16 %v651, %v650
  %v669 = vpack.c.b16 %v653, %v652
  %686 = vmatprep.subr.bf16.mxu0 0
  %687 = vmatpush1.bf16.msra.mxu0 %v661
  %688 = vmatprep.subr.bf16.mxu0 0
  %689 = vmatpush1.bf16.msra.mxu0 %v660
  %690 = vmatprep.subr.bf16.mxu0 0
  %691 = vmatpush1.bf16.msra.mxu0 %v659
  %692 = vmatprep.subr.bf16.mxu0 0
  %693 = vmatpush1.bf16.msra.mxu0 %v658
  %694 = vmatprep.subr.bf16.mxu0 0
  %695 = vmatpush1.bf16.msra.mxu0 %v657
  %696 = vmatprep.subr.bf16.mxu0 0
  %697 = vmatpush1.bf16.msra.mxu0 %v656
  %698 = vmatprep.subr.bf16.mxu0 0
  %699 = vmatpush1.bf16.msra.mxu0 %v655
  %700 = vmatprep.subr.bf16.mxu0 0
  %701 = vmatpush1.bf16.msra.mxu0 %v654
  %702 = vmatprep.subr.bf16.mxu0 0
  %703 = vmatpush2.bf16.msra.mxu0 %v669
  %704 = vmatprep.subr.bf16.mxu0 0
  %705 = vmatpush2.bf16.msra.mxu0 %v668
  %706 = vmatprep.subr.bf16.mxu0 0
  %707 = vmatpush2.bf16.msra.mxu0 %v667
  %708 = vmatprep.subr.bf16.mxu0 0
  %709 = vmatpush2.bf16.msra.mxu0 %v666
  %710 = vmatprep.subr.bf16.mxu0 0
  %711 = vmatpush2.bf16.msra.mxu0 %v665
  %712 = vmatprep.subr.bf16.mxu0 0
  %713 = vmatpush2.bf16.msra.mxu0 %v664
  %714 = vmatprep.subr.bf16.mxu0 0
  %715 = vmatpush2.bf16.msra.mxu0 %v663
  %716 = vmatprep.subr.bf16.mxu0 0
  %717 = vmatpush2.bf16.msra.mxu0 %v662
  %718 = vmatprep.mubr.bf16.mxu0 %v375
  %719 = vmatmul.mubr.bf16.gmra.mxu0 %v374
  %v720 = vpop.f32.mrf.mxu0
  %v721 = vadd.f32 %v588, %v720
  %v722 = vpop.f32.mrf.mxu0
  %v723 = vpop.f32.mrf.mxu0
  %v724 = vpop.f32.mrf.mxu0
  %725 = vdwg.mxu0
  %v727 = vlaneseq
  %v728 = vshrl.u32 %v727, 7
  %v729 = vsub.s32 0, %v728
  %v730 = vrot.slane %v40, %v729
  %v732 = vmul.f32 %v546, %v730
  %v733 = vtanh.pop %v732
  %v734 = vmul.f32 %v721, %v730
  %v735 = vmul.f32 %v733, 1.442695
  %v736 = vpow.pop %v735
  %v737 = vmul.f32 %v38, %v736
  %v738 = vadd.f32 %v737, %v734
  %v739 = vmul.f32 %v730, %v738
  %v740 = vadd.f32 %v47, %v739
  %vm741 = vcmask 15360
  %742 = vst.msk [vmem:[%s10] sm:$0xff] %vm741, %v740
  %744 = vrot.lane.b32.xlu0 %v733, 127
  %v745 = vpop.permute.xlu0 %744
  %v747 = vadd.f32 %v733, %v745
  %vm748 = vcmask 7168
  %749 = vst.msk [vmem:[%s11] sm:$0xff] %vm748, %v747
  // Predicated region
  $region42: #{tpu_custom_call.1} parent=0 // pred_check
    _
  $region43: #{tpu_custom_call.1} parent=0 // pred_check_branch
    %751 = sbr.rel (0) target = $region45
  $region44: #{tpu_custom_call.1} parent=0 // pred_region
    _
  $region45: #{tpu_custom_call.1} parent=0 // pred_fallthru
    _
  // Predicated region
  $region46: #{tpu_custom_call.1} parent=0 // pred_check
    _
  $region47: #{tpu_custom_call.1} parent=0 // pred_check_branch
    %753 = sbr.rel (0) target = $region49
  $region48: #{tpu_custom_call.1} parent=0 // pred_region
    _
  $region49: #{tpu_custom_call.1} parent=0 // pred_fallthru
    _
  // Predicated region
  $region50: #{tpu_custom_call.1} parent=0 // pred_check
    _
  $region51: #{tpu_custom_call.1} parent=0 // pred_check_branch
    %755 = sbr.rel (0) target = $region53
  $region52: #{tpu_custom_call.1} parent=0 // pred_region
    _
  $region53: #{tpu_custom_call.1} parent=0 // pred_fallthru
    _
  // Predicated region
  $region54: #{tpu_custom_call.1} parent=0 // pred_check
    _
  $region55: #{tpu_custom_call.1} parent=0 // pred_check_branch
    %757 = sbr.rel (0) target = $region57
  $region56: #{tpu_custom_call.1} parent=0 // pred_region
    _
  $region57: #{tpu_custom_call.1} parent=0 // pred_fallthru
    _

</llo_original>
